<compile_context>
chip_gen: v7x
topology: tpu7x:2x2x1
jax: 0.10.0
libtpu: 0.0.40
codegen_flags: <defaults>
</compile_context>

<pallas_src>
import functools

import jax
import jax.numpy as jnp
from jax.experimental import pallas as pl
from jax.experimental.pallas import tpu as pltpu

_SUBLANES = 8        # f32 vreg sublane count
_TB_MAX_ROWS = 512   # max batch rows per grid step (~7 MiB double-buffered VMEM)


def _per_pixel_linear_kernel(x_ref, w_ref, b_ref, o_ref, *, d_channels, p_pixels):
    # x_ref: (TG, 8, D*P)  input rows, channel-major lanes (dropped channel never DMA'd)
    # w_ref: (8, D*P)      per-pixel weights, replicated across the 8 sublanes
    # b_ref: (8, P)        per-pixel bias, replicated across the 8 sublanes
    # o_ref: (TG, 8, P)    output rows
    x = x_ref[...].astype(jnp.float32)   # no-op for f32; upcast if caller stores bf16
    w = w_ref[...]
    # Statically unrolled FMA chain over the tiny channel dim.  All slices are
    # lane slices at multiples of 128 (P % 128 == 0) -> free vreg selection;
    # params broadcast only over the leading (untiled) TG dim (vreg reuse).
    acc = x[:, :, 0:p_pixels] * w[None, :, 0:p_pixels]
    for c in range(1, d_channels):
        lo = c * p_pixels
        acc = acc + x[:, :, lo:lo + p_pixels] * w[None, :, lo:lo + p_pixels]
    o_ref[...] = (acc + b_ref[...][None, :, :]).astype(o_ref.dtype)


def init_local_net_params(weight, bias):
    """One-time parameter re-layout (init, NOT per forward call).

    weight: (P, 1, D) Conv1d weight; bias: (P,).
    Returns:
      w_rep: (8, D*P)  with w_rep[s, c*P + p] = weight[p, 0, c]
      b_rep: (8, P)    with b_rep[s, p]       = bias[p]
    """
    P, _, D = weight.shape
    w_row = jnp.transpose(weight[:, 0, :], (1, 0)).reshape(1, D * P)  # channel-major lanes
    b_row = bias.reshape(1, P)
    w_rep = jnp.tile(w_row.astype(jnp.float32), (_SUBLANES, 1))
    b_rep = jnp.tile(b_row.astype(jnp.float32), (_SUBLANES, 1))
    return w_rep, b_rep


def _choose_groups_per_step(n_groups):
    """Largest divisor of n_groups with <= _TB_MAX_ROWS rows per step; keeps the
    grid at >= 2 steps when possible so the 'parallel' axis can shard across
    v7x's two TensorCores."""
    max_tg = max(_TB_MAX_ROWS // _SUBLANES, 1)
    if n_groups >= 2:
        max_tg = min(max_tg, n_groups // 2)
    best = 1
    for tg in range(1, max_tg + 1):
        if n_groups % tg == 0:
            best = tg
    # TODO(synk): if n_groups is a large prime this degenerates to 8-row steps;
    # a masked tail block would avoid that.
    return best


def local_net_forward(x, w_rep, b_rep, width, height):
    """Forward pass of LocalNet.

    x:      (B, D+1, H, W) NCHW (last channel is dropped, as in torch)
    w_rep:  (8, D*P), b_rep: (8, P)  -- from init_local_net_params
    returns (B, 1, width, height)
    """
    B, C1, H, W = x.shape
    D = C1 - 1
    P = H * W
    assert H == width and W == height, "pixel ordering requires width==H, height==W"
    assert w_rep.shape == (_SUBLANES, D * P) and b_rep.shape == (_SUBLANES, P)
    # TODO(synk): if P is not a multiple of 128, pad P (params + output lanes)
    # to the next multiple of 128 to keep stores lane-dense.
    assert P % 128 == 0, "width*height must be a multiple of 128"

    # Free metadata reshape: (B, C1, H, W) -> (B, C1*P).  The dropped channel
    # occupies the last P lanes and is simply never covered by the x BlockSpec.
    x_flat = x.reshape(B, C1 * P)

    # Pad the batch to a multiple of 8 so every tile has dense sublane stores.
    b_pad = -(-B // _SUBLANES) * _SUBLANES
    if b_pad != B:
        x_flat = jnp.pad(x_flat, ((0, b_pad - B), (0, 0)))
    n_groups = b_pad // _SUBLANES
    x_g = x_flat.reshape(n_groups, _SUBLANES, C1 * P)   # free metadata reshape

    tg = _choose_groups_per_step(n_groups)
    grid = (n_groups // tg,)

    out_g = pl.pallas_call(
        functools.partial(_per_pixel_linear_kernel, d_channels=D, p_pixels=P),
        out_shape=jax.ShapeDtypeStruct((n_groups, _SUBLANES, P), x.dtype),
        grid=grid,
        in_specs=[
            # Only the first D*P lanes of each row: channel D is never read.
            pl.BlockSpec((tg, _SUBLANES, D * P), lambda i: (i, 0, 0)),
            pl.BlockSpec((_SUBLANES, D * P), lambda i: (0, 0)),   # weights (resident)
            pl.BlockSpec((_SUBLANES, P), lambda i: (0, 0)),       # bias (resident)
        ],
        out_specs=pl.BlockSpec((tg, _SUBLANES, P), lambda i: (i, 0, 0)),
        compiler_params=pltpu.CompilerParams(
            dimension_semantics=("parallel",),
        ),
    )(x_g, w_rep, b_rep)

    # Metadata-only reshapes back to the torch output layout.
    out_flat = out_g.reshape(b_pad, P)[:B]
    return out_flat.reshape(B, 1, width, height)


if __name__ == "__main__":
    # Config implied by the module: 3 aux variables -> input_depth D = 4,
    # input_width = input_height = 16.  LocalNet.forward receives D+1 = 5
    # channels and drops the last one.
    B, D, H, W = 2, 4, 16, 16
    width, height = H, W
    P = width * height
    C1 = D + 1

    key = jax.random.PRNGKey(0)
    kx, kw, kb = jax.random.split(key, 3)
    x = jax.random.normal(kx, (B, C1, H, W), dtype=jnp.float32)
    # Parameters in the original Conv1d layout: weight (P, 1, D), bias (P,).
    weight = jax.random.normal(kw, (P, 1, D), dtype=jnp.float32) * 0.1
    bias = jax.random.normal(kb, (P,), dtype=jnp.float32) * 0.1

    # One-time parameter re-layout ("init", not per forward call).
    w_rep, b_rep = init_local_net_params(weight, bias)

    fwd = jax.jit(functools.partial(local_net_forward, width=width, height=height))
    out = fwd(x, w_rep, b_rep)
    out = jax.block_until_ready(out)

    # Pure-JAX reference for correctness.
    x_in = x[:, :D].reshape(B, D, P)                               # (B, D, P)
    ref = jnp.einsum("bdp,pd->bp", x_in, weight[:, 0, :]) + bias[None, :]
    ref = ref.reshape(B, 1, width, height)

    assert out.shape == (B, 1, width, height)
    assert jnp.allclose(out, ref, atol=1e-5, rtol=1e-5)
    print("KERNEL_OK")
</pallas_src>

<mosaic_0001>
module attributes {stable_mosaic.version = 11 : i64} {
  func.func @_per_pixel_linear_kernel(%arg0: i32, %arg1: memref<1x8x1024xf32, #tpu.memory_space<vmem>>, %arg2: memref<8x1024xf32, #tpu.memory_space<vmem>>, %arg3: memref<8x256xf32, #tpu.memory_space<vmem>>, %arg4: memref<1x8x256xf32, #tpu.memory_space<vmem>>) attributes {dimension_semantics = [#tpu.dimension_semantics<parallel>], iteration_bounds = array<i64: 1>, scalar_prefetch = 0 : i64, scratch_operands = 0 : i64, tpu.core_type = #tpu.core_type<tc>, window_params = [{transform_indices = @transform_0, window_bounds = array<i64: 1, 8, 1024>}, {pipeline_mode = #tpu.pipeline_mode<synchronous>, transform_indices = @transform_1, window_bounds = array<i64: 8, 1024>}, {pipeline_mode = #tpu.pipeline_mode<synchronous>, transform_indices = @transform_2, window_bounds = array<i64: 8, 256>}, {transform_indices = @transform_3, window_bounds = array<i64: 1, 8, 256>}]} {
    %c0 = arith.constant 0 : index
    %c0_0 = arith.constant 0 : index
    %c0_1 = arith.constant 0 : index
    %0 = vector.load %arg1[%c0, %c0_0, %c0_1] : memref<1x8x1024xf32, #tpu.memory_space<vmem>>, vector<1x8x1024xf32>
    %c0_2 = arith.constant 0 : index
    %c0_3 = arith.constant 0 : index
    %1 = vector.load %arg2[%c0_2, %c0_3] : memref<8x1024xf32, #tpu.memory_space<vmem>>, vector<8x1024xf32>
    %2 = vector.extract_strided_slice %0 {offsets = [0, 0, 0], sizes = [1, 8, 256], strides = [1, 1, 1]} : vector<1x8x1024xf32> to vector<1x8x256xf32>
    %3 = vector.extract_strided_slice %1 {offsets = [0, 0], sizes = [8, 256], strides = [1, 1]} : vector<8x1024xf32> to vector<8x256xf32>
    %4 = vector.shape_cast %3 : vector<8x256xf32> to vector<1x8x256xf32>
    %5 = arith.mulf %2, %4 : vector<1x8x256xf32>
    %6 = vector.extract_strided_slice %0 {offsets = [0, 0, 256], sizes = [1, 8, 256], strides = [1, 1, 1]} : vector<1x8x1024xf32> to vector<1x8x256xf32>
    %7 = vector.extract_strided_slice %1 {offsets = [0, 256], sizes = [8, 256], strides = [1, 1]} : vector<8x1024xf32> to vector<8x256xf32>
    %8 = vector.shape_cast %7 : vector<8x256xf32> to vector<1x8x256xf32>
    %9 = arith.mulf %6, %8 : vector<1x8x256xf32>
    %10 = arith.addf %5, %9 : vector<1x8x256xf32>
    %11 = vector.extract_strided_slice %0 {offsets = [0, 0, 512], sizes = [1, 8, 256], strides = [1, 1, 1]} : vector<1x8x1024xf32> to vector<1x8x256xf32>
    %12 = vector.extract_strided_slice %1 {offsets = [0, 512], sizes = [8, 256], strides = [1, 1]} : vector<8x1024xf32> to vector<8x256xf32>
    %13 = vector.shape_cast %12 : vector<8x256xf32> to vector<1x8x256xf32>
    %14 = arith.mulf %11, %13 : vector<1x8x256xf32>
    %15 = arith.addf %10, %14 : vector<1x8x256xf32>
    %16 = vector.extract_strided_slice %0 {offsets = [0, 0, 768], sizes = [1, 8, 256], strides = [1, 1, 1]} : vector<1x8x1024xf32> to vector<1x8x256xf32>
    %17 = vector.extract_strided_slice %1 {offsets = [0, 768], sizes = [8, 256], strides = [1, 1]} : vector<8x1024xf32> to vector<8x256xf32>
    %18 = vector.shape_cast %17 : vector<8x256xf32> to vector<1x8x256xf32>
    %19 = arith.mulf %16, %18 : vector<1x8x256xf32>
    %20 = arith.addf %15, %19 : vector<1x8x256xf32>
    %c0_4 = arith.constant 0 : index
    %c0_5 = arith.constant 0 : index
    %21 = vector.load %arg3[%c0_4, %c0_5] : memref<8x256xf32, #tpu.memory_space<vmem>>, vector<8x256xf32>
    %22 = vector.shape_cast %21 : vector<8x256xf32> to vector<1x8x256xf32>
    %23 = arith.addf %20, %22 : vector<1x8x256xf32>
    %c0_6 = arith.constant 0 : index
    %c0_7 = arith.constant 0 : index
    %c0_8 = arith.constant 0 : index
    %24 = vector.load %arg4[%c0_6, %c0_7, %c0_8] : memref<1x8x256xf32, #tpu.memory_space<vmem>>, vector<1x8x256xf32>
    tpu.vector_store %arg4[%c0_6, %c0_7, %c0_8], %23 {strides = array<i32>} : memref<1x8x256xf32, #tpu.memory_space<vmem>>, vector<1x8x256xf32>,
    return
  }
  func.func @transform_0(%arg0: i32) -> (i32, i32, i32) {
    %c0_i32 = arith.constant 0 : i32
    %c0_i32_0 = arith.constant 0 : i32
    %c0_i32_1 = arith.constant 0 : i32
    return %arg0, %c0_i32, %c0_i32_0 : i32, i32, i32
  }
  func.func @transform_1(%arg0: i32) -> (i32, i32) {
    %c0_i32 = arith.constant 0 : i32
    %c0_i32_0 = arith.constant 0 : i32
    %c0_i32_1 = arith.constant 0 : i32
    return %c0_i32, %c0_i32_0 : i32, i32
  }
  func.func @transform_2(%arg0: i32) -> (i32, i32) {
    %c0_i32 = arith.constant 0 : i32
    %c0_i32_0 = arith.constant 0 : i32
    %c0_i32_1 = arith.constant 0 : i32
    return %c0_i32, %c0_i32_0 : i32, i32
  }
  func.func @transform_3(%arg0: i32) -> (i32, i32, i32) {
    %c0_i32 = arith.constant 0 : i32
    %c0_i32_0 = arith.constant 0 : i32
    %c0_i32_1 = arith.constant 0 : i32
    return %arg0, %c0_i32, %c0_i32_0 : i32, i32, i32
  }
}

</mosaic_0001>

<llo_original>
// kernel: local_net_forward.1
$region0: #{local_net_forward.1}
  #allocation0 [shape = 'u32[]', space=smem, size = 0x4, offset = 0x4, fixed_abs, tag = 'smem constant byte address 0x4 - core index']
  #allocation1 [shape = 'u32[144,128]{1,0:T(1,128)}', space=vmem, size = 0x12000, scoped, tag = 'internal scratch']
  %s0 = inlined_call_operand.vmem [shape: f32[1,8,1280], index: 0, kind: input, shape index: {}]
  %s1 = inlined_call_operand.vmem [shape: f32[8,1024], index: 1, kind: input, shape index: {}]
  %s2 = inlined_call_operand.vmem [shape: f32[8,256], index: 2, kind: input, shape index: {}]
  %s3 = inlined_call_operand.vmem [shape: f32[1,8,256], index: 3, kind: output, shape index: {}]
  %s4 = sld [smem:[#allocation0]]
  $region22: #{local_net_forward.1} parent=0
    _
  %s6 = ssub.s32 1, %s4
  %s7 = scalar_select 0, %s6, %s4
  // Predicated region
  $region2: #{local_net_forward.1} parent=0 // pred_check
    _
  $region3: #{local_net_forward.1} parent=0 // pred_check_branch
    %9 = sbr.rel (0) target = $region5
  $region4: #{local_net_forward.1} parent=0 // pred_region
    _
  $region5: #{local_net_forward.1} parent=0 // pred_fallthru
    _
  // Predicated region
  $region6: #{local_net_forward.1} parent=0 // pred_check
    _
  $region7: #{local_net_forward.1} parent=0 // pred_check_branch
    %11 = sbr.rel (0) target = $region9
  $region8: #{local_net_forward.1} parent=0 // pred_region
    _
  $region9: #{local_net_forward.1} parent=0 // pred_fallthru
    _
  // Predicated region
  $region10: #{local_net_forward.1} parent=0 // pred_check
    _
  $region11: #{local_net_forward.1} parent=0 // pred_check_branch
    %13 = sbr.rel (0) target = $region13
  $region12: #{local_net_forward.1} parent=0 // pred_region
    _
  $region13: #{local_net_forward.1} parent=0 // pred_fallthru
    _
  %v14 = vld [vmem:[%s0] sm:$0xff]
  %v15 = vld [vmem:[%s0 + $0x8] sm:$0xff]
  %v16 = vld [vmem:[%s0 + $0x10] sm:$0xff]
  %v17 = vld [vmem:[%s0 + $0x18] sm:$0xff]
  %v18 = vld [vmem:[%s0 + $0x20] sm:$0xff]
  %v19 = vld [vmem:[%s0 + $0x28] sm:$0xff]
  %v20 = vld [vmem:[%s0 + $0x30] sm:$0xff]
  %v21 = vld [vmem:[%s0 + $0x38] sm:$0xff]
  %v22 = vld [vmem:[%s1] sm:$0xff]
  %v23 = vld [vmem:[%s1 + $0x8] sm:$0xff]
  %v24 = vld [vmem:[%s1 + $0x10] sm:$0xff]
  %v25 = vld [vmem:[%s1 + $0x18] sm:$0xff]
  %v26 = vld [vmem:[%s1 + $0x20] sm:$0xff]
  %v27 = vld [vmem:[%s1 + $0x28] sm:$0xff]
  %v28 = vld [vmem:[%s1 + $0x30] sm:$0xff]
  %v29 = vld [vmem:[%s1 + $0x38] sm:$0xff]
  %v30 = vmul.f32 %v14, %v22
  %v31 = vmul.f32 %v15, %v23
  %v32 = vmul.f32 %v16, %v24
  %v33 = vmul.f32 %v17, %v25
  %v34 = vadd.f32 %v30, %v32
  %v35 = vadd.f32 %v31, %v33
  %v36 = vmul.f32 %v18, %v26
  %v37 = vmul.f32 %v19, %v27
  %v38 = vadd.f32 %v34, %v36
  %v39 = vadd.f32 %v35, %v37
  %v40 = vmul.f32 %v20, %v28
  %v41 = vmul.f32 %v21, %v29
  %v42 = vadd.f32 %v38, %v40
  %v43 = vadd.f32 %v39, %v41
  %v44 = vld [vmem:[%s2] sm:$0xff]
  %v45 = vld [vmem:[%s2 + $0x8] sm:$0xff]
  %v46 = vadd.f32 %v42, %v44
  %v47 = vadd.f32 %v43, %v45
  %48 = vst [vmem:[%s3] sm:$0xff] %v46
  %49 = vst [vmem:[%s3 + $0x8] sm:$0xff] %v47
  // Predicated region
  $region14: #{local_net_forward.1} parent=0 // pred_check
    _
  $region15: #{local_net_forward.1} parent=0 // pred_check_branch
    %51 = sbr.rel (0) target = $region17
  $region16: #{local_net_forward.1} parent=0 // pred_region
    _
  $region17: #{local_net_forward.1} parent=0 // pred_fallthru
    _
  // Predicated region
  $region18: #{local_net_forward.1} parent=0 // pred_check
    _
  $region19: #{local_net_forward.1} parent=0 // pred_check_branch
    %53 = sbr.rel (0) target = $region21
  $region20: #{local_net_forward.1} parent=0 // pred_region
    _
  $region21: #{local_net_forward.1} parent=0 // pred_fallthru
    _

</llo_original>
